<compile_context>
chip_gen: v5e
topology: v5e:2x2
jax: 0.10.0
libtpu: 0.0.40
codegen_flags: <defaults>
</compile_context>

<pallas_src>
import math

import jax
import jax.numpy as jnp
from jax import lax
from jax.experimental import pallas as pl
from jax.experimental.pallas import tpu as pltpu


def decoder_kernel(x_ref, w1_ref, b1_ref, w2_ref, b2_ref, wa_ref,
                   w3_ref, b3_ref, w4_ref, b4_ref, out_ref):
    BL = x_ref.shape[0]          # B * L rows handled in this grid step
    B = out_ref.shape[-1]        # samples per step
    L = BL // B                  # sequence length
    cdt = w1_ref.dtype           # MXU operand dtype (f32 or bf16)
    adt = b1_ref.dtype           # elementwise/activation dtype (f32 or bf16)

    def dense_relu(inp, w_ref, b_ref):
        # MXU matmul with f32 accumulation; bias + relu in the activation
        # dtype (bf16 on v6e/v7x halves the temporaries and vld/vst traffic).
        acc = jnp.dot(inp, w_ref[...], preferred_element_type=jnp.float32)
        return jnp.maximum(acc.astype(adt) + b_ref[...], 0).astype(cdt)

    # dense_1 / dense_2 as single (B*L, .) matmuls -- fills the MXU M dim.
    h1 = dense_relu(x_ref[...], w1_ref, b1_ref)                     # (B*L, H)
    h2 = dense_relu(h1, w2_ref, b2_ref)                             # (B*L, H)

    # Attention1d logits (conv1d kernel=1, H -> 1), lane-oriented (1, B*L).
    # Same contraction pattern as q @ k.T in flash attention (MXU-native).
    # The conv bias `ba` is omitted: softmax is shift invariant.
    logits = lax.dot_general(
        wa_ref[...], h2, (((1,), (1,)), ((), ())),
        preferred_element_type=jnp.float32)                         # (1, B*L)

    # Block-diagonal masked softmax over each sample's L columns, in f32.
    # exp runs only once over the (1, B*L) row: build a per-column shift by a
    # masked sublane reduce of the per-sample max.
    row = lax.broadcasted_iota(jnp.int32, (B, BL), 0)
    col = lax.broadcasted_iota(jnp.int32, (B, BL), 1)
    mask = (col >= row * L) & (col < (row + 1) * L)                  # (B, B*L)
    m = jnp.max(jnp.where(mask, logits, -1e30), axis=-1,
                keepdims=True)                                       # (B, 1)
    shift = jnp.sum(jnp.where(mask, m, 0.0), axis=0, keepdims=True)  # (1, B*L)
    e = jnp.exp(logits - shift)                                      # (1, B*L)
    p = jnp.where(mask, e, 0.0)                                      # (B, B*L)
    denom = jnp.sum(p, axis=-1, keepdims=True)                       # (B, 1)

    # Attention pooling on the MXU with deferred normalization:
    # (B, B*L) @ (B*L, H) -> (B, H), then scale rows by 1/denom.
    pooled_un = jnp.dot(p.astype(cdt), h2,
                        preferred_element_type=jnp.float32)          # (B, H)
    pooled = pooled_un * (1.0 / denom)                               # (B, H) f32

    # dense_3 + relu.
    h3 = dense_relu(pooled.astype(cdt), w3_ref, b3_ref)              # (B, H)

    # dense_4 producing a lane-dense (1, B) row: w4_row (1,H) . h3^T.
    out_row = lax.dot_general(
        w4_ref[...], h3, (((1,), (1,)), ((), ())),
        preferred_element_type=jnp.float32) + b4_ref[0, 0]           # (1, B)
    out_ref[...] = out_row.reshape(1, 1, B).astype(out_ref.dtype)


def _full_spec(arr):
    nd = arr.ndim
    # TODO(synk): mark these resident (constant-index) specs single-buffered
    # via pipeline_mode=pl.Buffered(1) once verified on the target jax version
    # to reclaim the duplicate weight VMEM (matters most on v7x's 64 MiB).
    return pl.BlockSpec(arr.shape, lambda g, _nd=nd: (0,) * _nd)


def decoder_forward(x, params, *, block_batch=None,
                    compute_dtype=jnp.float32, activation_dtype=None,
                    vmem_limit_bytes=None):
    """Decoder forward pass as a single Pallas kernel.

    x: (N, L, input_dim) float32.  Returns (N, 1) float32.

    compute_dtype:     MXU operand dtype (bf16 recommended on all generations).
    activation_dtype:  bias/relu elementwise dtype; defaults to compute_dtype.
                       Pass jnp.float32 on v5e (no bf16 VPU/EUP).
    """
    N, L, Din = x.shape
    H = params["w1"].shape[1]
    cdt = jnp.dtype(compute_dtype)
    if activation_dtype is None:
        adt = cdt
    else:
        adt = jnp.dtype(activation_dtype)
    csz, asz = cdt.itemsize, adt.itemsize

    # ------------------------------------------------------------------ VMEM
    if vmem_limit_bytes is None:
        try:
            cap = int(getattr(pltpu.get_tpu_info(), "vmem_capacity_bytes",
                              128 << 20))
        except Exception:                      # non-TPU context: safe default
            cap = 128 << 20
        # 128 MiB chips (v5e/v6e) -> 64 MiB scoped; 64 MiB chips (v7x) -> 32.
        vmem_limit_bytes = max(32 << 20, min(cap // 2, 64 << 20))
    vmem_limit_bytes = int(vmem_limit_bytes)

    # Resident weights/biases (Pallas double-buffers them by default).
    weight_bytes = 2 * ((Din * H + 2 * H * H + 2 * H) * csz + 3 * H * asz)

    def step_bytes(Bc):
        """Rough per-grid-step VMEM footprint for block-batch Bc."""
        BL = Bc * L
        b = 2 * BL * Din * csz               # double-buffered x block
        b += BL * H * (4 + 2 * asz)          # f32 matmul accum + h1 + h2
        if asz != csz:
            b += 2 * BL * H * csz            # extra casts feeding next matmul
        b += 2 * BL * 4                      # logits + exp row
        b += 3 * Bc * BL * 4                 # mask / shifted / p block-diag
        b += 8 * Bc * H * 4                  # pooled / h3 / small tails
        return b

    budget = int(0.75 * vmem_limit_bytes) - weight_bytes - (2 << 20)

    # --------------------------------------------------------- block sizing
    # Sublane multiple required for the (B*L, Din) sub-block: 8 rows for f32,
    # 16 for bf16 operands.
    sub = 8 * (4 // csz)
    need = sub // math.gcd(L, sub)           # smallest B with (B*L) % sub == 0

    def rup(v, m):
        return -(-v // m) * m

    if block_batch is None:
        target_rows = 1024                   # MXU-M target (multiple of 256)
        B = max(need, rup(max(1, -(-target_rows // L)), need))
        B = min(B, rup(N, need))             # never more than one step of pad
        # v7x megacore: prefer >= 2 grid steps when each half still gets a
        # reasonably sized (>= 256 rows) block.
        half = rup(-(-N // 2), need)
        if half < rup(N, need) and half * L >= 256:
            B = min(B, half)
        # Shrink until the per-step footprint fits the VMEM budget.
        while B > need and step_bytes(B) > budget:
            B -= need
        B = max(B, need)
    else:
        B = max(need, rup(int(block_batch), need))
    # TODO(synk): for very large L (e.g. ESM1b L~1022) add an L-tiled
    # "arbitrary" grid axis with an online-softmax accumulator instead of
    # keeping the whole (B*L, .) activation set resident.

    G = -(-N // B)                           # grid steps (cdiv)
    N_pad = G * B
    assert (B * L) % sub == 0

    # ------------------------------------------------------------ operands
    x_flat = x.reshape(N * L, Din)
    if N_pad != N:
        x_flat = jnp.pad(x_flat, ((0, (N_pad - N) * L), (0, 0)))
    x_flat = x_flat.astype(cdt)

    w1 = params["w1"].astype(cdt)
    w2 = params["w2"].astype(cdt)
    w3 = params["w3"].astype(cdt)
    wa = params["wa"].reshape(1, H).astype(cdt)   # (H,1)->(1,H); `ba` folded out
    w4 = params["w4"].reshape(1, H).astype(cdt)   # (H,1)->(1,H)
    b1 = params["b1"].astype(adt)
    b2 = params["b2"].astype(adt)
    b3 = params["b3"].astype(adt)
    b4 = params["b4"].astype(jnp.float32)         # (1,1) scalar -> SMEM

    out = pl.pallas_call(
        decoder_kernel,
        out_shape=jax.ShapeDtypeStruct((G, 1, B), jnp.float32),
        grid_spec=pl.GridSpec(
            grid=(G,),
            in_specs=[
                pl.BlockSpec((B * L, Din), lambda g: (g, 0)),
                _full_spec(w1), _full_spec(b1),
                _full_spec(w2), _full_spec(b2),
                _full_spec(wa),
                _full_spec(w3), _full_spec(b3),
                _full_spec(w4),
                pl.BlockSpec(memory_space=pltpu.MemorySpace.SMEM),
            ],
            out_specs=pl.BlockSpec((1, 1, B), lambda g: (g, 0, 0)),
        ),
        compiler_params=pltpu.CompilerParams(
            dimension_semantics=("parallel",),   # v7x's 2 TCs split the steps
            vmem_limit_bytes=vmem_limit_bytes),
    )(x_flat, w1, b1, w2, b2, wa, w3, b3, w4, b4)

    return out.reshape(G * B, 1)[:N]              # (N, 1)


def init_params(key, input_dim, hidden_dim):
    """Deterministic PyTorch-style (uniform +/- 1/sqrt(fan_in)) init."""
    ks = jax.random.split(key, 10)

    def lin(kw, kb, fan_in, fan_out):
        bound = 1.0 / jnp.sqrt(jnp.float32(fan_in))
        w = jax.random.uniform(kw, (fan_in, fan_out), jnp.float32, -bound, bound)
        b = jax.random.uniform(kb, (1, fan_out), jnp.float32, -bound, bound)
        return w, b

    w1, b1 = lin(ks[0], ks[1], input_dim, hidden_dim)      # dense_1
    w2, b2 = lin(ks[2], ks[3], hidden_dim, hidden_dim)     # dense_2
    wa, ba = lin(ks[4], ks[5], hidden_dim, 1)              # attention1d conv1d(k=1)
    w3, b3 = lin(ks[6], ks[7], hidden_dim, hidden_dim)     # dense_3
    w4, b4 = lin(ks[8], ks[9], hidden_dim, 1)              # dense_4
    return dict(w1=w1, b1=b1, w2=w2, b2=b2, wa=wa, ba=ba,
                w3=w3, b3=b3, w4=w4, b4=b4)


def decoder_reference(x, p):
    """Pure-JAX reference matching the PyTorch forward (including ba)."""
    h1 = jax.nn.relu(x @ p["w1"] + p["b1"])
    h2 = jax.nn.relu(h1 @ p["w2"] + p["b2"])
    logits = (h2 @ p["wa"] + p["ba"])[..., 0]               # (N, L)
    attn = jax.nn.softmax(logits, axis=-1)[..., None]       # (N, L, 1)
    pooled = jnp.sum(attn * h2, axis=1)                     # (N, H)
    h3 = jax.nn.relu(pooled @ p["w3"] + p["b3"])
    return h3 @ p["w4"] + p["b4"]                           # (N, 1)


if __name__ == "__main__":
    N, L, INPUT_DIM, HIDDEN_DIM = 6, 8, 32, 32

    key = jax.random.PRNGKey(0)
    kx, kp = jax.random.split(key)
    x = jax.random.normal(kx, (N, L, INPUT_DIM), dtype=jnp.float32)
    params = init_params(kp, INPUT_DIM, HIDDEN_DIM)

    y_ref = jax.block_until_ready(decoder_reference(x, params))

    # f32 path, auto block size (all samples in one grid step at this N).
    y = jax.block_until_ready(decoder_forward(x, params))
    assert y.shape == (N, 1), y.shape
    assert jnp.allclose(y, y_ref, atol=1e-4, rtol=1e-4), (y, y_ref)

    # f32, multi-step grid with batch padding (B=4 -> 2 steps, N padded 6->8).
    y2 = jax.block_until_ready(decoder_forward(x, params, block_batch=4))
    assert jnp.allclose(y2, y_ref, atol=1e-4, rtol=1e-4), (y2, y_ref)

    # bf16 MXU operands + bf16 activations (v6e/v7x style); loose check.
    y_bf16 = jax.block_until_ready(
        decoder_forward(x, params, compute_dtype=jnp.bfloat16))
    assert y_bf16.shape == (N, 1)
    assert bool(jnp.all(jnp.isfinite(y_bf16)))
    assert float(jnp.max(jnp.abs(y_bf16 - y_ref))) < 0.25

    # bf16 MXU operands with f32 elementwise math (v5e style); loose check.
    y_v5e = jax.block_until_ready(
        decoder_forward(x, params, compute_dtype=jnp.bfloat16,
                        activation_dtype=jnp.float32))
    assert float(jnp.max(jnp.abs(y_v5e - y_ref))) < 0.25

    print("KERNEL_OK")
</pallas_src>

<mosaic_0001>
module attributes {stable_mosaic.version = 11 : i64} {
  func.func @decoder_kernel(%arg0: i32, %arg1: memref<48x32xf32, #tpu.memory_space<vmem>>, %arg2: memref<32x32xf32, #tpu.memory_space<vmem>>, %arg3: memref<1x32xf32, #tpu.memory_space<vmem>>, %arg4: memref<32x32xf32, #tpu.memory_space<vmem>>, %arg5: memref<1x32xf32, #tpu.memory_space<vmem>>, %arg6: memref<1x32xf32, #tpu.memory_space<vmem>>, %arg7: memref<32x32xf32, #tpu.memory_space<vmem>>, %arg8: memref<1x32xf32, #tpu.memory_space<vmem>>, %arg9: memref<1x32xf32, #tpu.memory_space<vmem>>, %arg10: memref<1x1xf32, #tpu.memory_space<smem>>, %arg11: memref<1x1x6xf32, #tpu.memory_space<vmem>>) attributes {dimension_semantics = [#tpu.dimension_semantics<parallel>], iteration_bounds = array<i64: 1>, scalar_prefetch = 0 : i64, scratch_operands = 0 : i64, tpu.core_type = #tpu.core_type<tc>, window_params = [{transform_indices = @transform_0, window_bounds = array<i64: 48, 32>}, {pipeline_mode = #tpu.pipeline_mode<synchronous>, transform_indices = @transform_1, window_bounds = array<i64: 32, 32>}, {pipeline_mode = #tpu.pipeline_mode<synchronous>, transform_indices = @transform_2, window_bounds = array<i64: 1, 32>}, {pipeline_mode = #tpu.pipeline_mode<synchronous>, transform_indices = @transform_3, window_bounds = array<i64: 32, 32>}, {pipeline_mode = #tpu.pipeline_mode<synchronous>, transform_indices = @transform_4, window_bounds = array<i64: 1, 32>}, {pipeline_mode = #tpu.pipeline_mode<synchronous>, transform_indices = @transform_5, window_bounds = array<i64: 1, 32>}, {pipeline_mode = #tpu.pipeline_mode<synchronous>, transform_indices = @transform_6, window_bounds = array<i64: 32, 32>}, {pipeline_mode = #tpu.pipeline_mode<synchronous>, transform_indices = @transform_7, window_bounds = array<i64: 1, 32>}, {pipeline_mode = #tpu.pipeline_mode<synchronous>, transform_indices = @transform_8, window_bounds = array<i64: 1, 32>}, {transform_indices = @transform_9, window_bounds = array<i64: 1, 1>}, {transform_indices = @transform_10, window_bounds = array<i64: 1, 1, 6>}]} {
    %c0 = arith.constant 0 : index
    %c0_0 = arith.constant 0 : index
    %0 = vector.load %arg1[%c0, %c0_0] : memref<48x32xf32, #tpu.memory_space<vmem>>, vector<48x32xf32>
    %c0_1 = arith.constant 0 : index
    %c0_2 = arith.constant 0 : index
    %1 = vector.load %arg2[%c0_1, %c0_2] : memref<32x32xf32, #tpu.memory_space<vmem>>, vector<32x32xf32>
    %cst = arith.constant dense<0.000000e+00> : vector<48x32xf32>
    %2 = tpu.matmul %0, %1, %cst {dimension_numbers = #tpu.dot_dimension_numbers<[1], [0], [0], [1], [0, 0, 1, 1], [], []>} : vector<48x32xf32>, vector<32x32xf32>, vector<48x32xf32> -> vector<48x32xf32>
    %c0_3 = arith.constant 0 : index
    %c0_4 = arith.constant 0 : index
    %3 = vector.load %arg3[%c0_3, %c0_4] : memref<1x32xf32, #tpu.memory_space<vmem>>, vector<1x32xf32>
    %4 = vector.broadcast %3 : vector<1x32xf32> to vector<48x32xf32>
    %5 = arith.addf %2, %4 : vector<48x32xf32>
    %cst_5 = arith.constant 0.000000e+00 : f32
    %6 = vector.broadcast %cst_5 : f32 to vector<48x32xf32>
    %7 = arith.maximumf %5, %6 : vector<48x32xf32>
    %c0_6 = arith.constant 0 : index
    %c0_7 = arith.constant 0 : index
    %8 = vector.load %arg4[%c0_6, %c0_7] : memref<32x32xf32, #tpu.memory_space<vmem>>, vector<32x32xf32>
    %cst_8 = arith.constant dense<0.000000e+00> : vector<48x32xf32>
    %9 = tpu.matmul %7, %8, %cst_8 {dimension_numbers = #tpu.dot_dimension_numbers<[1], [0], [0], [1], [0, 0, 1, 1], [], []>} : vector<48x32xf32>, vector<32x32xf32>, vector<48x32xf32> -> vector<48x32xf32>
    %c0_9 = arith.constant 0 : index
    %c0_10 = arith.constant 0 : index
    %10 = vector.load %arg5[%c0_9, %c0_10] : memref<1x32xf32, #tpu.memory_space<vmem>>, vector<1x32xf32>
    %11 = vector.broadcast %10 : vector<1x32xf32> to vector<48x32xf32>
    %12 = arith.addf %9, %11 : vector<48x32xf32>
    %cst_11 = arith.constant 0.000000e+00 : f32
    %13 = vector.broadcast %cst_11 : f32 to vector<48x32xf32>
    %14 = arith.maximumf %12, %13 : vector<48x32xf32>
    %c0_12 = arith.constant 0 : index
    %c0_13 = arith.constant 0 : index
    %15 = vector.load %arg6[%c0_12, %c0_13] : memref<1x32xf32, #tpu.memory_space<vmem>>, vector<1x32xf32>
    %cst_14 = arith.constant dense<0.000000e+00> : vector<1x48xf32>
    %16 = tpu.matmul %15, %14, %cst_14 {dimension_numbers = #tpu.dot_dimension_numbers<[1], [1], [0], [0], [0, 0, 1, 0], [], []>} : vector<1x32xf32>, vector<48x32xf32>, vector<1x48xf32> -> vector<1x48xf32>
    %17 = tpu.iota {dimensions = array<i32: 0>} : vector<6x48xi32>
    %18 = tpu.iota {dimensions = array<i32: 1>} : vector<6x48xi32>
    %c8_i32 = arith.constant 8 : i32
    %19 = vector.broadcast %c8_i32 : i32 to vector<6x48xi32>
    %20 = arith.muli %17, %19 : vector<6x48xi32>
    %21 = arith.cmpi sge, %18, %20 : vector<6x48xi32>
    %c1_i32 = arith.constant 1 : i32
    %22 = vector.broadcast %c1_i32 : i32 to vector<6x48xi32>
    %23 = arith.addi %17, %22 : vector<6x48xi32>
    %c8_i32_15 = arith.constant 8 : i32
    %24 = vector.broadcast %c8_i32_15 : i32 to vector<6x48xi32>
    %25 = arith.muli %23, %24 : vector<6x48xi32>
    %26 = arith.cmpi slt, %18, %25 : vector<6x48xi32>
    %27 = arith.andi %21, %26 : vector<6x48xi1>
    %cst_16 = arith.constant -1.000000e+30 : f32
    %28 = vector.shape_cast %16 : vector<1x48xf32> to vector<1x48xf32>
    %29 = vector.broadcast %28 : vector<1x48xf32> to vector<6x48xf32>
    %30 = vector.broadcast %cst_16 : f32 to vector<6x48xf32>
    %31 = arith.select %27, %29, %30 : vector<6x48xi1>, vector<6x48xf32>
    %cst_17 = arith.constant dense<0xFF800000> : vector<6xf32>
    %32 = vector.multi_reduction <maximumf>, %31, %cst_17 [1] : vector<6x48xf32> to vector<6xf32>
    %33 = vector.shape_cast %32 : vector<6xf32> to vector<6x1xf32>
    %cst_18 = arith.constant 0.000000e+00 : f32
    %34 = vector.shape_cast %33 : vector<6x1xf32> to vector<6x1xf32>
    %35 = vector.broadcast %34 : vector<6x1xf32> to vector<6x48xf32>
    %36 = vector.broadcast %cst_18 : f32 to vector<6x48xf32>
    %37 = arith.select %27, %35, %36 : vector<6x48xi1>, vector<6x48xf32>
    %cst_19 = arith.constant dense<0.000000e+00> : vector<48xf32>
    %38 = vector.multi_reduction <add>, %37, %cst_19 [0] : vector<6x48xf32> to vector<48xf32>
    %39 = vector.shape_cast %38 : vector<48xf32> to vector<1x48xf32>
    %40 = arith.subf %16, %39 : vector<1x48xf32>
    %41 = math.exp %40 : vector<1x48xf32>
    %cst_20 = arith.constant 0.000000e+00 : f32
    %42 = vector.shape_cast %41 : vector<1x48xf32> to vector<1x48xf32>
    %43 = vector.broadcast %42 : vector<1x48xf32> to vector<6x48xf32>
    %44 = vector.broadcast %cst_20 : f32 to vector<6x48xf32>
    %45 = arith.select %27, %43, %44 : vector<6x48xi1>, vector<6x48xf32>
    %cst_21 = arith.constant dense<0.000000e+00> : vector<6xf32>
    %46 = vector.multi_reduction <add>, %45, %cst_21 [1] : vector<6x48xf32> to vector<6xf32>
    %47 = vector.shape_cast %46 : vector<6xf32> to vector<6x1xf32>
    %cst_22 = arith.constant dense<0.000000e+00> : vector<6x32xf32>
    %48 = tpu.matmul %45, %14, %cst_22 {dimension_numbers = #tpu.dot_dimension_numbers<[1], [0], [0], [1], [0, 0, 1, 1], [], []>} : vector<6x48xf32>, vector<48x32xf32>, vector<6x32xf32> -> vector<6x32xf32>
    %cst_23 = arith.constant 1.000000e+00 : f32
    %49 = vector.broadcast %cst_23 : f32 to vector<6x1xf32>
    %50 = arith.divf %49, %47 : vector<6x1xf32>
    %51 = vector.broadcast %50 : vector<6x1xf32> to vector<6x32xf32>
    %52 = arith.mulf %48, %51 : vector<6x32xf32>
    %c0_24 = arith.constant 0 : index
    %c0_25 = arith.constant 0 : index
    %53 = vector.load %arg7[%c0_24, %c0_25] : memref<32x32xf32, #tpu.memory_space<vmem>>, vector<32x32xf32>
    %cst_26 = arith.constant dense<0.000000e+00> : vector<6x32xf32>
    %54 = tpu.matmul %52, %53, %cst_26 {dimension_numbers = #tpu.dot_dimension_numbers<[1], [0], [0], [1], [0, 0, 1, 1], [], []>} : vector<6x32xf32>, vector<32x32xf32>, vector<6x32xf32> -> vector<6x32xf32>
    %c0_27 = arith.constant 0 : index
    %c0_28 = arith.constant 0 : index
    %55 = vector.load %arg8[%c0_27, %c0_28] : memref<1x32xf32, #tpu.memory_space<vmem>>, vector<1x32xf32>
    %56 = vector.broadcast %55 : vector<1x32xf32> to vector<6x32xf32>
    %57 = arith.addf %54, %56 : vector<6x32xf32>
    %cst_29 = arith.constant 0.000000e+00 : f32
    %58 = vector.broadcast %cst_29 : f32 to vector<6x32xf32>
    %59 = arith.maximumf %57, %58 : vector<6x32xf32>
    %c0_30 = arith.constant 0 : index
    %c0_31 = arith.constant 0 : index
    %60 = vector.load %arg9[%c0_30, %c0_31] : memref<1x32xf32, #tpu.memory_space<vmem>>, vector<1x32xf32>
    %cst_32 = arith.constant dense<0.000000e+00> : vector<1x6xf32>
    %61 = tpu.matmul %60, %59, %cst_32 {dimension_numbers = #tpu.dot_dimension_numbers<[1], [1], [0], [0], [0, 0, 1, 0], [], []>} : vector<1x32xf32>, vector<6x32xf32>, vector<1x6xf32> -> vector<1x6xf32>
    %c0_33 = arith.constant 0 : index
    %c0_34 = arith.constant 0 : index
    %62 = memref.load %arg10[%c0_33, %c0_34] : memref<1x1xf32, #tpu.memory_space<smem>>
    %63 = vector.broadcast %62 : f32 to vector<1x6xf32>
    %64 = arith.addf %61, %63 : vector<1x6xf32>
    %65 = vector.shape_cast %64 : vector<1x6xf32> to vector<1x1x6xf32>
    %c0_35 = arith.constant 0 : index
    %c0_36 = arith.constant 0 : index
    %c0_37 = arith.constant 0 : index
    %66 = vector.load %arg11[%c0_35, %c0_36, %c0_37] : memref<1x1x6xf32, #tpu.memory_space<vmem>>, vector<1x1x6xf32>
    tpu.vector_store %arg11[%c0_35, %c0_36, %c0_37], %65 {strides = array<i32>} : memref<1x1x6xf32, #tpu.memory_space<vmem>>, vector<1x1x6xf32>,
    return
  }
  func.func @transform_0(%arg0: i32) -> (i32, i32) {
    %c0_i32 = arith.constant 0 : i32
    %c0_i32_0 = arith.constant 0 : i32
    return %arg0, %c0_i32 : i32, i32
  }
  func.func @transform_1(%arg0: i32) -> (i32, i32) {
    %c0_i32 = arith.constant 0 : i32
    %c0_i32_0 = arith.constant 0 : i32
    %c0_i32_1 = arith.constant 0 : i32
    return %c0_i32, %c0_i32_0 : i32, i32
  }
  func.func @transform_2(%arg0: i32) -> (i32, i32) {
    %c0_i32 = arith.constant 0 : i32
    %c0_i32_0 = arith.constant 0 : i32
    %c0_i32_1 = arith.constant 0 : i32
    return %c0_i32, %c0_i32_0 : i32, i32
  }
  func.func @transform_3(%arg0: i32) -> (i32, i32) {
    %c0_i32 = arith.constant 0 : i32
    %c0_i32_0 = arith.constant 0 : i32
    %c0_i32_1 = arith.constant 0 : i32
    return %c0_i32, %c0_i32_0 : i32, i32
  }
  func.func @transform_4(%arg0: i32) -> (i32, i32) {
    %c0_i32 = arith.constant 0 : i32
    %c0_i32_0 = arith.constant 0 : i32
    %c0_i32_1 = arith.constant 0 : i32
    return %c0_i32, %c0_i32_0 : i32, i32
  }
  func.func @transform_5(%arg0: i32) -> (i32, i32) {
    %c0_i32 = arith.constant 0 : i32
    %c0_i32_0 = arith.constant 0 : i32
    %c0_i32_1 = arith.constant 0 : i32
    return %c0_i32, %c0_i32_0 : i32, i32
  }
  func.func @transform_6(%arg0: i32) -> (i32, i32) {
    %c0_i32 = arith.constant 0 : i32
    %c0_i32_0 = arith.constant 0 : i32
    %c0_i32_1 = arith.constant 0 : i32
    return %c0_i32, %c0_i32_0 : i32, i32
  }
  func.func @transform_7(%arg0: i32) -> (i32, i32) {
    %c0_i32 = arith.constant 0 : i32
    %c0_i32_0 = arith.constant 0 : i32
    %c0_i32_1 = arith.constant 0 : i32
    return %c0_i32, %c0_i32_0 : i32, i32
  }
  func.func @transform_8(%arg0: i32) -> (i32, i32) {
    %c0_i32 = arith.constant 0 : i32
    %c0_i32_0 = arith.constant 0 : i32
    %c0_i32_1 = arith.constant 0 : i32
    return %c0_i32, %c0_i32_0 : i32, i32
  }
  func.func @transform_9(%arg0: i32) -> (i32, i32) {
    %c0_i32 = arith.constant 0 : i32
    %c0_i32_0 = arith.constant 0 : i32
    %c0_i32_1 = arith.constant 0 : i32
    return %c0_i32, %c0_i32_0 : i32, i32
  }
  func.func @transform_10(%arg0: i32) -> (i32, i32, i32) {
    %c0_i32 = arith.constant 0 : i32
    %c0_i32_0 = arith.constant 0 : i32
    %c0_i32_1 = arith.constant 0 : i32
    return %arg0, %c0_i32, %c0_i32_0 : i32, i32, i32
  }
}

</mosaic_0001>

<llo_original>
// kernel: tpu_custom_call.1
$region0: #{tpu_custom_call.1}
  #allocation0 [shape = 'u32[]', space=smem, size = 0x4, offset = 0x4, fixed_abs, tag = 'smem constant byte address 0x4 - core index']
  #allocation1 [shape = 'u32[72,128]{1,0:T(1,128)}', space=vmem, size = 0x9000, scoped, tag = 'internal scratch']
  #allocation2 [shape = 'f32[1,1]{1,0:T(1,128)S(6)}', space=smem, size = 0x200, scoped, tag = 'scoped memory for tpu_custom_call.1']
  %s0 = inlined_call_operand.vmem [shape: f32[48,32], index: 0, kind: input, shape index: {}]
  %s1 = inlined_call_operand.vmem [shape: f32[32,32], index: 1, kind: input, shape index: {}]
  %s2 = inlined_call_operand.vmem [shape: f32[1,32], index: 2, kind: input, shape index: {}]
  %s3 = inlined_call_operand.vmem [shape: f32[32,32], index: 3, kind: input, shape index: {}]
  %s4 = inlined_call_operand.vmem [shape: f32[1,32], index: 4, kind: input, shape index: {}]
  %s5 = inlined_call_operand.vmem [shape: f32[1,32], index: 5, kind: input, shape index: {}]
  %s6 = inlined_call_operand.hbm [shape: f32[32,32], index: 6, kind: input, shape index: {}]
  %s7 = inlined_call_operand.vmem [shape: f32[1,32], index: 7, kind: input, shape index: {}]
  %s8 = inlined_call_operand.vmem [shape: f32[1,32], index: 8, kind: input, shape index: {}]
  %s9 = inlined_call_operand.<no memory space> [shape: f32[1,1], index: 9, kind: input, shape index: {}]
  %s10 = inlined_call_operand.hbm [shape: f32[1,1,6], index: 10, kind: output, shape index: {}]
  %s11 = sld [smem:[#allocation0]]
  $region54: #{tpu_custom_call.1} parent=0
    _
  %s13 = ssub.s32 1, %s11
  %s14 = scalar_select 0, %s13, %s11
  %15 = sst [smem:[#allocation2]] %s9
  $region1: #{tpu_custom_call.1} parent=0
    #allocation3 [shape = 'u8[16384]{0}', space=vmem, size = 0x4000, scoped, tag = 'input window, operand 6, single buffered']
    #allocation4 [shape = 's32[1]{0}', space=sflag, size = 0x4, scoped, tag = 'scoped memory for tpu_custom_call.1']
    #allocation5 [shape = 's32[1]{0}', space=sflag, size = 0x4, scoped, tag = 'scoped memory for tpu_custom_call.1']
    #allocation6 [shape = 'u8[512]{0}', space=vmem, size = 0x400, scoped, tag = 'output window, operand 0, single buffered']
    %16 = vsyncpa [#allocation4], 0
    %17 = vsyncpa [#allocation5], 0
    // Predicated region
    $region2: #{tpu_custom_call.1} parent=1 // pred_check
      _
    $region3: #{tpu_custom_call.1} parent=1 // pred_check_branch
      %19 = sbr.rel (0) target = $region5
    $region4: #{tpu_custom_call.1} parent=1 // pred_region
      _
    $region5: #{tpu_custom_call.1} parent=1 // pred_fallthru
      _
    // Predicated region
    $region6: #{tpu_custom_call.1} parent=1 // pred_check
      _
    $region7: #{tpu_custom_call.1} parent=1 // pred_check_branch
      %21 = sbr.rel (0) target = $region9
    $region8: #{tpu_custom_call.1} parent=1 // pred_region
      _
    $region9: #{tpu_custom_call.1} parent=1 // pred_fallthru
      _
    // Predicated region
    $region10: #{tpu_custom_call.1} parent=1 // pred_check
      _
    $region11: #{tpu_custom_call.1} parent=1 // pred_check_branch
      %23 = sbr.rel (0) target = $region13
    $region12: #{tpu_custom_call.1} parent=1 // pred_region
      _
    $region13: #{tpu_custom_call.1} parent=1 // pred_fallthru
      _
    // Predicated region
    $region14: #{tpu_custom_call.1} parent=1 // pred_check
      _
    $region15: #{tpu_custom_call.1} parent=1 // pred_check_branch
      %25 = sbr.rel (0) target = $region17
    $region16: #{tpu_custom_call.1} parent=1 // pred_region
      _
    $region17: #{tpu_custom_call.1} parent=1 // pred_fallthru
      _
    // Predicated region
    $region18: #{tpu_custom_call.1} parent=1 // pred_check
      _
    $region19: #{tpu_custom_call.1} parent=1 // pred_check_branch
      %27 = sbr.rel (0) target = $region21
    $region20: #{tpu_custom_call.1} parent=1 // pred_region
      _
    $region21: #{tpu_custom_call.1} parent=1 // pred_fallthru
      _
    // Predicated region
    $region22: #{tpu_custom_call.1} parent=1 // pred_check
      _
    $region23: #{tpu_custom_call.1} parent=1 // pred_check_branch
      %29 = sbr.rel (0) target = $region25
    $region24: #{tpu_custom_call.1} parent=1 // pred_region
      _
    $region25: #{tpu_custom_call.1} parent=1 // pred_fallthru
      _
    // Predicated region
    $region26: #{tpu_custom_call.1} parent=1 // pred_check
      _
    $region27: #{tpu_custom_call.1} parent=1 // pred_check_branch
      %31 = sbr.rel (0) target = $region29
    $region28: #{tpu_custom_call.1} parent=1 // pred_region
      %33 = vsyncadd [#allocation4], 0
      %s34 = sshll.u32 %s6, 4
      %s35 = int_to_ptr.hbm [resolvable:$true] %s34
      %s36 = sshll.u32 [#allocation3], 4
      %s37 = int_to_ptr.vmem [resolvable:$true] %s36
      %42 = dma.hbm_to_vmem [thread:$0]  %s35, 512, %s37, [#allocation4], 128, 128, 8
    $region29: #{tpu_custom_call.1} parent=1 // pred_fallthru
      _
    // Predicated region
    $region30: #{tpu_custom_call.1} parent=1 // pred_check
      _
    $region31: #{tpu_custom_call.1} parent=1 // pred_check_branch
      %44 = sbr.rel (0) target = $region33
    $region32: #{tpu_custom_call.1} parent=1 // pred_region
      _
    $region33: #{tpu_custom_call.1} parent=1 // pred_fallthru
      _
    // Predicated region
    $region34: #{tpu_custom_call.1} parent=1 // pred_check
      _
    $region35: #{tpu_custom_call.1} parent=1 // pred_check_branch
      %46 = sbr.rel (0) target = $region37
    $region36: #{tpu_custom_call.1} parent=1 // pred_region
      _
    $region37: #{tpu_custom_call.1} parent=1 // pred_fallthru
      _
    // Predicated region
    $region38: #{tpu_custom_call.1} parent=1 // pred_check
      _
    $region39: #{tpu_custom_call.1} parent=1 // pred_check_branch
      %48 = sbr.rel (0) target = $region41
    $region40: #{tpu_custom_call.1} parent=1 // pred_region
      _
    $region41: #{tpu_custom_call.1} parent=1 // pred_fallthru
      _
    // Predicated region
    $region42: #{tpu_custom_call.1} parent=1 // pred_check
      _
    $region43: #{tpu_custom_call.1} parent=1 // pred_check_branch
      %50 = sbr.rel (0) target = $region45
    $region44: #{tpu_custom_call.1} parent=1 // pred_region
      %52 = dma.done [#allocation4], 512
    $region45: #{tpu_custom_call.1} parent=1 // pred_fallthru
      _
    %v53 = vld [vmem:[%s0] sm:$0xff]
    %v54 = vld [vmem:[%s0 + $0x8] sm:$0xff]
    %v55 = vld [vmem:[%s0 + $0x10] sm:$0xff]
    %v56 = vld [vmem:[%s0 + $0x18] sm:$0xff]
    %v57 = vld [vmem:[%s0 + $0x20] sm:$0xff]
    %v58 = vld [vmem:[%s0 + $0x28] sm:$0xff]
    %v59 = vld [vmem:[%s1] sm:$0xff]
    %v60 = vld [vmem:[%s1 + $0x8] sm:$0xff]
    %v61 = vld [vmem:[%s1 + $0x10] sm:$0xff]
    %v62 = vld [vmem:[%s1 + $0x18] sm:$0xff]
    %v63 = vld [vmem:[%s2] sm:$0x1]
    %v65 = vperm.slane %v63, 0
    %vm67 = vcmask 261120
    %v69 = vsel %vm67, %v53, 0
    %v72 = vsel %vm67, %v54, 0
    %v75 = vsel %vm67, %v55, 0
    %v78 = vsel %vm67, %v56, 0
    %v81 = vsel %vm67, %v57, 0
    %v84 = vsel %vm67, %v58, 0
    %86 = vmatpush.msra.mxu0 0.0
    %87 = vmatpush.msra.mxu0 0.0
    %88 = vmatpush.msra.mxu0 0.0
    %89 = vmatpush.msra.mxu0 0.0
    %90 = vmatpush.msra.mxu0 0.0
    %91 = vmatpush.msra.mxu0 0.0
    %92 = vmatpush.msra.mxu0 0.0
    %93 = vmatpush.msra.mxu0 0.0
    %94 = vmatpush.msra.mxu0 0.0
    %95 = vmatpush.msra.mxu0 0.0
    %96 = vmatpush.msra.mxu0 0.0
    %97 = vmatpush.msra.mxu0 0.0
    %98 = vmatpush.msra.mxu0 %v62
    %99 = vmatpush.msra.mxu0 %v61
    %100 = vmatpush.msra.mxu0 %v60
    %101 = vmatpush.msra.mxu0 %v59
    %102 = vmatmul.f32.gmra.mxu0 %v69
    %v103 = vpop.f32.mrf.mxu0
    %v104 = vadd.f32 %v65, %v103
    %105 = vmatmul.f32.gmra.mxu0 %v72
    %v106 = vpop.f32.mrf.mxu0
    %v107 = vadd.f32 %v65, %v106
    %108 = vmatmul.f32.gmra.mxu0 %v75
    %v109 = vpop.f32.mrf.mxu0
    %v110 = vadd.f32 %v65, %v109
    %111 = vmatmul.f32.gmra.mxu0 %v78
    %v112 = vpop.f32.mrf.mxu0
    %v113 = vadd.f32 %v65, %v112
    %114 = vmatmul.f32.gmra.mxu0 %v81
    %v115 = vpop.f32.mrf.mxu0
    %v116 = vadd.f32 %v65, %v115
    %117 = vmatmul.f32.gmra.mxu0 %v84
    %v118 = vpop.f32.mrf.mxu0
    %v119 = vadd.f32 %v65, %v118
    %120 = vdwg.mxu0
    %v121 = vmax.f32 %v104, 0.0
    %v122 = vmax.f32 %v107, 0.0
    %v123 = vmax.f32 %v110, 0.0
    %v124 = vmax.f32 %v113, 0.0
    %v125 = vmax.f32 %v116, 0.0
    %v126 = vmax.f32 %v119, 0.0
    %v127 = vld [vmem:[%s3] sm:$0xff]
    %v128 = vld [vmem:[%s3 + $0x8] sm:$0xff]
    %v129 = vld [vmem:[%s3 + $0x10] sm:$0xff]
    %v130 = vld [vmem:[%s3 + $0x18] sm:$0xff]
    %v131 = vld [vmem:[%s4] sm:$0x1]
    %v133 = vperm.slane %v131, 0
    %v136 = vsel %vm67, %v121, 0
    %v139 = vsel %vm67, %v122, 0
    %v142 = vsel %vm67, %v123, 0
    %v145 = vsel %vm67, %v124, 0
    %v148 = vsel %vm67, %v125, 0
    %v151 = vsel %vm67, %v126, 0
    %153 = vmatpush.msra.mxu0 0.0
    %154 = vmatpush.msra.mxu0 0.0
    %155 = vmatpush.msra.mxu0 0.0
    %156 = vmatpush.msra.mxu0 0.0
    %157 = vmatpush.msra.mxu0 0.0
    %158 = vmatpush.msra.mxu0 0.0
    %159 = vmatpush.msra.mxu0 0.0
    %160 = vmatpush.msra.mxu0 0.0
    %161 = vmatpush.msra.mxu0 0.0
    %162 = vmatpush.msra.mxu0 0.0
    %163 = vmatpush.msra.mxu0 0.0
    %164 = vmatpush.msra.mxu0 0.0
    %165 = vmatpush.msra.mxu0 %v130
    %166 = vmatpush.msra.mxu0 %v129
    %167 = vmatpush.msra.mxu0 %v128
    %168 = vmatpush.msra.mxu0 %v127
    %169 = vmatmul.f32.gmra.mxu0 %v136
    %v170 = vpop.f32.mrf.mxu0
    %v171 = vadd.f32 %v133, %v170
    %172 = vmatmul.f32.gmra.mxu0 %v139
    %v173 = vpop.f32.mrf.mxu0
    %v174 = vadd.f32 %v133, %v173
    %175 = vmatmul.f32.gmra.mxu0 %v142
    %v176 = vpop.f32.mrf.mxu0
    %v177 = vadd.f32 %v133, %v176
    %178 = vmatmul.f32.gmra.mxu0 %v145
    %v179 = vpop.f32.mrf.mxu0
    %v180 = vadd.f32 %v133, %v179
    %181 = vmatmul.f32.gmra.mxu0 %v148
    %v182 = vpop.f32.mrf.mxu0
    %v183 = vadd.f32 %v133, %v182
    %184 = vmatmul.f32.gmra.mxu0 %v151
    %v185 = vpop.f32.mrf.mxu0
    %v186 = vadd.f32 %v133, %v185
    %187 = vdwg.mxu0
    %v188 = vmax.f32 %v171, 0.0
    %v189 = vmax.f32 %v174, 0.0
    %v190 = vmax.f32 %v177, 0.0
    %v191 = vmax.f32 %v180, 0.0
    %v192 = vmax.f32 %v183, 0.0
    %v193 = vmax.f32 %v186, 0.0
    %v194 = vld [vmem:[%s5] sm:$0x1]
    %v196 = vsel %vm67, %v194, 0
    %v199 = vsel %vm67, %v188, 0
    %v202 = vsel %vm67, %v189, 0
    %v205 = vsel %vm67, %v190, 0
    %v208 = vsel %vm67, %v191, 0
    %v211 = vsel %vm67, %v192, 0
    %v214 = vsel %vm67, %v193, 0
    %216 = vmatpush.xpose.msra.mxu0 0.0
    %217 = vmatpush.xpose.msra.mxu0 0.0
    %218 = vmatpush.xpose.msra.mxu0 0.0
    %219 = vmatpush.xpose.msra.mxu0 0.0
    %220 = vmatpush.xpose.msra.mxu0 0.0
    %221 = vmatpush.xpose.msra.mxu0 0.0
    %222 = vmatpush.xpose.msra.mxu0 0.0
    %223 = vmatpush.xpose.msra.mxu0 0.0
    %224 = vmatpush.xpose.msra.mxu0 0.0
    %225 = vmatpush.xpose.msra.mxu0 0.0
    %226 = vmatpush.xpose.msra.mxu0 %v214
    %227 = vmatpush.xpose.msra.mxu0 %v211
    %228 = vmatpush.xpose.msra.mxu0 %v208
    %229 = vmatpush.xpose.msra.mxu0 %v205
    %230 = vmatpush.xpose.msra.mxu0 %v202
    %231 = vmatpush.xpose.msra.mxu0 %v199
    %232 = vmatmul.f32.gmra.mxu0 %v196
    %v233 = vpop.f32.mrf.mxu0
    %v234 = vadd.f32 0.0, %v233
    %235 = vdwg.mxu0
    %v236 = vlaneseq
    %v237 = vshrl.u32 %v236, 7
    %v238 = vlaneseq
    %v239 = vand.u32 %v238, 127
    %v240 = vmul.u32 %v237, 8
    %vm241 = vcmp.ge.s32.totalorder %v239, %v240
    %v242 = vadd.s32 %v237, 1
    %v243 = vmul.u32 %v242, 8
    %vm244 = vcmp.lt.s32.totalorder %v239, %v243
    %vm245 = vmand %vm241, %vm244
    %v246 = vperm.slane %v234, 0
    %v247 = vsel %vm245, %v246, -1e+30
    %vm248 = vcmask 390144
    %v249 = vsel %vm248, %v247, -inf
    %250 = vmax.xlane.f32.xlu0 %v249
    %v251 = vpop.xlane.xlu0 %250
    %v252 = vsel %vm245, %v251, 0.0
    %v253 = vsel %vm248, %v252, 0.0
    %v254 = vrot.slane %v253, 4
    %v255 = vadd.f32 %v253, %v254
    %v256 = vrot.slane %v255, 2
    %v257 = vadd.f32 %v255, %v256
    %v258 = vrot.slane %v257, 1
    %v259 = vadd.f32 %v257, %v258
    %v260 = vsub.f32 %v234, %v259
    %v261 = vmul.f32 %v260, 1.442695
    %v262 = vpow.pop %v261
    %v263 = vperm.slane %v262, 0
    %v264 = vsel %vm245, %v263, 0.0
    %v265 = vsel %vm248, %v264, 0.0
    %266 = vadd.xlane.f32.xlu0 %v265
    %v267 = vpop.xlane.xlu0 %266
    %vm268 = vcmask 392192
    %v270 = vsel %vm268, %v264, 0
    %272 = vmatpush.msra.mxu0 0.0
    %273 = vmatpush.msra.mxu0 0.0
    %274 = vmatpush.msra.mxu0 0.0
    %275 = vmatpush.msra.mxu0 0.0
    %276 = vmatpush.msra.mxu0 0.0
    %277 = vmatpush.msra.mxu0 0.0
    %278 = vmatpush.msra.mxu0 0.0
    %279 = vmatpush.msra.mxu0 0.0
    %280 = vmatpush.msra.mxu0 0.0
    %281 = vmatpush.msra.mxu0 0.0
    %282 = vmatpush.msra.mxu0 %v193
    %283 = vmatpush.msra.mxu0 %v192
    %284 = vmatpush.msra.mxu0 %v191
    %285 = vmatpush.msra.mxu0 %v190
    %286 = vmatpush.msra.mxu0 %v189
    %287 = vmatpush.msra.mxu0 %v188
    %288 = vmatmul.f32.gmra.mxu0 %v270
    %v289 = vpop.f32.mrf.mxu0
    %v290 = vadd.f32 0.0, %v289
    %291 = vdwg.mxu0
    %v292 = vrcp.pop %v267
    %v293 = vmul.f32 %v267, %v292
    %v294 = vsub.f32 1.0, %v293
    %v295 = vmul.f32 %v292, %v294
    %v296 = vadd.f32 %v292, %v295
    %vm297 = vweird.f32 %v267
    %vm298 = vweird.f32 %v292
    %vm299 = vmor %vm297, %vm298
    %v300 = vsel %vm299, %v292, %v296
    %v301 = vand.u32 2147483647, %v267
    %vm302 = vcmp.eq.f32.partialorder %v301, 8.507059e+37
    %v303 = vand.u32 %v267, 2147483648
    %v304 = vor.u32 1.1754944e-38, %v303
    %v305 = vsel %vm302, %v304, %v300
    %v306 = vmul.f32 1.0, %v305
    %v307 = vmul.f32 %v290, %v306
    %v308 = vld [vmem:[#allocation3] sm:$0xff]
    %v309 = vld [vmem:[#allocation3 + $0x8] sm:$0xff]
    %v310 = vld [vmem:[#allocation3 + $0x10] sm:$0xff]
    %v311 = vld [vmem:[#allocation3 + $0x18] sm:$0xff]
    %v312 = vld [vmem:[%s7] sm:$0x1]
    %v314 = vperm.slane %v312, 0
    %v317 = vsel %vm67, %v307, 0
    %319 = vmatpush.msra.mxu0 0.0
    %320 = vmatpush.msra.mxu0 0.0
    %321 = vmatpush.msra.mxu0 0.0
    %322 = vmatpush.msra.mxu0 0.0
    %323 = vmatpush.msra.mxu0 0.0
    %324 = vmatpush.msra.mxu0 0.0
    %325 = vmatpush.msra.mxu0 0.0
    %326 = vmatpush.msra.mxu0 0.0
    %327 = vmatpush.msra.mxu0 0.0
    %328 = vmatpush.msra.mxu0 0.0
    %329 = vmatpush.msra.mxu0 0.0
    %330 = vmatpush.msra.mxu0 0.0
    %331 = vmatpush.msra.mxu0 %v311
    %332 = vmatpush.msra.mxu0 %v310
    %333 = vmatpush.msra.mxu0 %v309
    %334 = vmatpush.msra.mxu0 %v308
    %335 = vmatmul.f32.gmra.mxu0 %v317
    %v336 = vpop.f32.mrf.mxu0
    %v337 = vadd.f32 %v314, %v336
    %338 = vdwg.mxu0
    %v339 = vmax.f32 %v337, 0.0
    %v340 = vld [vmem:[%s8] sm:$0x1]
    %s341 = sld [smem:[#allocation2]]
    %v342 = vstv %s341
    %v344 = vsel %vm67, %v340, 0
    %v347 = vsel %vm67, %v339, 0
    %349 = vmatpush.xpose.msra.mxu0 0.0
    %350 = vmatpush.xpose.msra.mxu0 0.0
    %351 = vmatpush.xpose.msra.mxu0 0.0
    %352 = vmatpush.xpose.msra.mxu0 0.0
    %353 = vmatpush.xpose.msra.mxu0 0.0
    %354 = vmatpush.xpose.msra.mxu0 0.0
    %355 = vmatpush.xpose.msra.mxu0 0.0
    %356 = vmatpush.xpose.msra.mxu0 0.0
    %357 = vmatpush.xpose.msra.mxu0 0.0
    %358 = vmatpush.xpose.msra.mxu0 0.0
    %359 = vmatpush.xpose.msra.mxu0 0.0
    %360 = vmatpush.xpose.msra.mxu0 0.0
    %361 = vmatpush.xpose.msra.mxu0 0.0
    %362 = vmatpush.xpose.msra.mxu0 0.0
    %363 = vmatpush.xpose.msra.mxu0 0.0
    %364 = vmatpush.xpose.msra.mxu0 %v347
    %365 = vmatmul.f32.gmra.mxu0 %v344
    %v366 = vpop.f32.mrf.mxu0
    %v367 = vadd.f32 %v342, %v366
    %368 = vdwg.mxu0
    %vm369 = vcmask 40960
    %370 = vst.msk [vmem:[#allocation6] sm:$0x1] %vm369, %v367
    // Predicated region
    $region46: #{tpu_custom_call.1} parent=1 // pred_check
      _
    $region47: #{tpu_custom_call.1} parent=1 // pred_check_branch
      %372 = sbr.rel (0) target = $region49
    $region48: #{tpu_custom_call.1} parent=1 // pred_region
      %374 = vsyncadd [#allocation5], 0
      %s376 = sshll.u32 [#allocation6], 4
      %s377 = int_to_ptr.vmem [resolvable:$true] %s376
      %s378 = sshll.u32 %s10, 4
      %s379 = int_to_ptr.hbm [resolvable:$true] %s378
      %381 = dma.vmem_to_hbm [thread:$0]  %s377, 16, %s379, [#allocation5]
    $region49: #{tpu_custom_call.1} parent=1 // pred_fallthru
      _
    // Predicated region
    $region50: #{tpu_custom_call.1} parent=1 // pred_check
      _
    $region51: #{tpu_custom_call.1} parent=1 // pred_check_branch
      %383 = sbr.rel (0) target = $region53
    $region52: #{tpu_custom_call.1} parent=1 // pred_region
      %385 = dma.done [#allocation5], 16
    $region53: #{tpu_custom_call.1} parent=1 // pred_fallthru
      _
    %386 = vsyncpa [#allocation4], 1
    %387 = vsyncpa [#allocation5], 1

</llo_original>
